<compile_context>
chip_gen: v7x
topology: tpu7x:2x2x1
jax: 0.10.0
libtpu: 0.0.40
codegen_flags: <defaults>
</compile_context>

<pallas_src>
import functools
import math

import jax
import jax.numpy as jnp
from jax.experimental import pallas as pl
from jax.experimental.pallas import tpu as pltpu


def _round_up(x, m):
    return ((x + m - 1) // m) * m


def _cdiv(a, b):
    return (a + b - 1) // b


def _physical_vmem_bytes():
    try:
        return int(pltpu.get_tpu_info().vmem_capacity_bytes)
    except Exception:
        return 64 << 20  # conservative fallback (v7x per-TensorCore)


def _mlp_kernel(x_ref, w_ref, b_ref, o_ref, acc_ref, *, t_total, block_t, inv_t):
    # x_ref: (TB, TT, IN)   w_ref: (IN, OUT_p)   b_ref: (1, OUT_p) f32
    # o_ref: (TB, OUT_p)    acc_ref: (TB, IN) f32 scratch (lives across the T axis)
    ti = pl.program_id(1)

    @pl.when(ti == 0)
    def _init():
        acc_ref[...] = jnp.zeros_like(acc_ref)

    xb = x_ref[...].astype(jnp.float32)                       # (TB, TT, IN)
    if t_total % block_t != 0:
        # Ragged last T tile: zero rows past the true sequence length.  Use
        # jnp.where (not multiply) so undefined padding (possibly NaN) can't leak.
        valid = t_total - ti * block_t
        row = jax.lax.broadcasted_iota(jnp.int32, xb.shape, dimension=1)
        xb = jnp.where(row < valid, xb, 0.0)
    # Streaming partial sum over this T chunk; hidden under the x DMA stream.
    acc_ref[...] += jnp.sum(xb, axis=1)

    @pl.when(ti == pl.num_programs(1) - 1)
    def _finalize():
        xm = acc_ref[...] * inv_t                             # mean over the TRUE T
        y = jnp.dot(xm, w_ref[...].astype(jnp.float32),
                    preferred_element_type=jnp.float32)       # (TB, OUT_p)
        y = y + b_ref[...]                                    # bias added once
        o_ref[...] = y.astype(o_ref.dtype)


def mlp_forward(x, w, b, *, block_b=None, block_t=None,
                x_block_budget_bytes=None, single_buffer_weights=True):
    """x: (B, T, IN), w: (IN, OUT), b: (OUT,) -> (B, OUT). Matches MLP.forward."""
    B, T, IN = x.shape
    assert w.shape[0] == IN
    OUT = w.shape[1]
    orig_dtype = x.dtype
    x_itemsize = jnp.dtype(x.dtype).itemsize
    w_itemsize = jnp.dtype(w.dtype).itemsize
    out_itemsize = jnp.dtype(orig_dtype).itemsize

    # --- generation-aware VMEM budgeting --------------------------------------
    phys_vmem = _physical_vmem_bytes()
    safe_vmem = int(phys_vmem * 0.70)                 # headroom for compiler temps
    if x_block_budget_bytes is None:
        # Large streamed tiles amortize the ~0.35us/step overhead, but keep the
        # two x buffers to at most ~half of the safe VMEM envelope.
        x_block_budget_bytes = max(1 << 20, min(16 << 20, safe_vmem // 4))

    # --- tile sizes ------------------------------------------------------------
    sub_t = max(8, 32 // x_itemsize)                  # sublane pack: 8 f32, 16 bf16
    sub_b = max(8, 32 // out_itemsize)
    if block_b is None:
        if B <= sub_b:
            block_b = B                               # single block == full dim
        else:
            # >=2 blocks on the parallel axis so both v7x TensorCores get work.
            block_b = min(_round_up(_cdiv(B, 2), sub_b), 256)
    TB = block_b

    if block_t is None:
        # Shrink TB first when even a minimal T tile would overflow the budget
        # (large IN), so the double-buffered x tile can't blow past VMEM.
        while TB > 8 and TB * sub_t * IN * x_itemsize > x_block_budget_bytes:
            TB = max(8, _round_up(TB // 2, 8))
        tt_cap = (x_block_budget_bytes // (TB * IN * x_itemsize)) // sub_t * sub_t
        tt_cap = max(sub_t, tt_cap)
        block_t = T if T <= tt_cap else tt_cap
    TT = min(block_t, T)

    # Lane-dense output: pad only the tiny weight/bias along OUT (never x).
    OUT_p = _round_up(OUT, 128)
    if OUT_p != OUT:
        w = jnp.pad(w, ((0, 0), (0, OUT_p - OUT)))
        b = jnp.pad(b, (0, OUT_p - OUT))
    b2 = b.reshape(1, OUT_p).astype(jnp.float32)

    grid = (_cdiv(B, TB), _cdiv(T, TT))

    # --- explicit VMEM limit from the actual footprint --------------------------
    vmem_needed = (2 * TB * TT * IN * x_itemsize                 # double-buffered x
                   + 2 * (IN * OUT_p * w_itemsize + OUT_p * 4)   # weights + bias
                   + TB * IN * 4                                 # f32 accumulator
                   + 2 * TB * OUT_p * out_itemsize)              # output tile
    vmem_limit = int(min(max(vmem_needed * 5 // 4 + (2 << 20), 32 << 20),
                         int(phys_vmem * 0.75)))

    kernel = functools.partial(_mlp_kernel, t_total=T, block_t=TT, inv_t=1.0 / T)

    def _call(weight_buffering):
        wb_kwargs = {}
        if weight_buffering is not None:
            # Grid-invariant w/b tiles: nothing to prefetch -> 1 buffer saves VMEM.
            wb_kwargs = dict(pipeline_mode=pl.Buffered(weight_buffering))
        return pl.pallas_call(
            kernel,
            out_shape=jax.ShapeDtypeStruct((B, OUT_p), orig_dtype),
            grid_spec=pltpu.PrefetchScalarGridSpec(
                num_scalar_prefetch=0,
                grid=grid,
                in_specs=[
                    pl.BlockSpec((TB, TT, IN), lambda bi, ti: (bi, ti, 0)),
                    pl.BlockSpec((IN, OUT_p), lambda bi, ti: (0, 0), **wb_kwargs),
                    pl.BlockSpec((1, OUT_p), lambda bi, ti: (0, 0), **wb_kwargs),
                ],
                out_specs=pl.BlockSpec((TB, OUT_p), lambda bi, ti: (bi, 0)),
                scratch_shapes=[pltpu.VMEM((TB, IN), jnp.float32)],
            ),
            compiler_params=pltpu.CompilerParams(
                dimension_semantics=("parallel", "arbitrary"),
                vmem_limit_bytes=vmem_limit),
        )(x, w, b2)

    if single_buffer_weights:
        try:
            out = _call(1)
        except Exception:
            # Older/stricter Pallas versions may reject pipeline_mode; fall back.
            out = _call(None)
    else:
        out = _call(None)

    return out[:, :OUT]


def reference(x, w, b):
    y = jnp.einsum("bti,io->bto", x, w) + b     # fc1
    return jnp.mean(y, axis=1)                  # transpose + AdaptiveAvgPool1d(1) + squeeze


if __name__ == "__main__":
    key = jax.random.PRNGKey(0)

    # Shapes consistent with MLP.forward: x (B, T, IN) -> (B, OUT)
    B, T, IN, OUT = 2, 8, 32, 16
    kx, kw, kb = jax.random.split(key, 3)
    x = jax.random.normal(kx, (B, T, IN), dtype=jnp.float32)
    # Deterministic init mimicking nn.Linear's uniform(-1/sqrt(in), 1/sqrt(in))
    bound = 1.0 / math.sqrt(IN)
    w = jax.random.uniform(kw, (IN, OUT), minval=-bound, maxval=bound, dtype=jnp.float32)
    b = jax.random.uniform(kb, (OUT,), minval=-bound, maxval=bound, dtype=jnp.float32)

    # 1) Basic f32 path.
    ref = reference(x, w, b)
    out = jax.block_until_ready(mlp_forward(x, w, b))
    assert out.shape == (B, OUT)
    assert jnp.allclose(out, ref, atol=1e-5, rtol=1e-5), "f32 path mismatch"

    # 2) Ragged T tile + ragged batch tile (exercises in-kernel mask, no jnp.pad,
    #    and >=2 blocks on the parallel batch axis).
    B2, T2 = 20, 37
    x2 = jax.random.normal(jax.random.PRNGKey(1), (B2, T2, IN), dtype=jnp.float32)
    ref2 = reference(x2, w, b)
    out2 = jax.block_until_ready(mlp_forward(x2, w, b, block_t=16))
    assert out2.shape == (B2, OUT)
    assert jnp.allclose(out2, ref2, atol=1e-4, rtol=1e-4), "ragged path mismatch"

    # 3) bf16 streaming path: used only when x already arrives in bf16 (no wrapper cast).
    x3 = x.astype(jnp.bfloat16)
    ref3 = reference(x3.astype(jnp.float32), w, b)
    out3 = jax.block_until_ready(mlp_forward(x3, w, b))
    assert out3.shape == (B, OUT)
    assert jnp.allclose(out3.astype(jnp.float32), ref3, atol=3e-2, rtol=3e-2), "bf16 path mismatch"

    print("KERNEL_OK")
</pallas_src>

<mosaic_0001>
module attributes {stable_mosaic.version = 11 : i64} {
  func.func @_mlp_kernel(%arg0: i32, %arg1: i32, %arg2: memref<2x8x32xf32, #tpu.memory_space<vmem>>, %arg3: memref<32x128xf32, #tpu.memory_space<vmem>>, %arg4: memref<1x128xf32, #tpu.memory_space<vmem>>, %arg5: memref<2x128xf32, #tpu.memory_space<vmem>>, %arg6: memref<2x32xf32, #tpu.memory_space<vmem>>) attributes {dimension_semantics = [#tpu.dimension_semantics<parallel>, #tpu.dimension_semantics<arbitrary>], iteration_bounds = array<i64: 1, 1>, scalar_prefetch = 0 : i64, scratch_operands = 1 : i64, tpu.core_type = #tpu.core_type<tc>, window_params = [{transform_indices = @transform_0, window_bounds = array<i64: 2, 8, 32>}, {pipeline_mode = #tpu.pipeline_mode<synchronous>, transform_indices = @transform_1, window_bounds = array<i64: 32, 128>}, {pipeline_mode = #tpu.pipeline_mode<synchronous>, transform_indices = @transform_2, window_bounds = array<i64: 1, 128>}, {transform_indices = @transform_3, window_bounds = array<i64: 2, 128>}]} {
    %c0_i32 = arith.constant 0 : i32
    %0 = arith.cmpi eq, %arg1, %c0_i32 : i32
    %1 = arith.extui %0 : i1 to i32
    %c0_i32_0 = arith.constant 0 : i32
    %2 = arith.cmpi ne, %1, %c0_i32_0 : i32
    scf.if %2 {
      %cst_9 = arith.constant 0.000000e+00 : f32
      %11 = vector.broadcast %cst_9 : f32 to vector<2x32xf32>
      %c0_10 = arith.constant 0 : index
      %c0_11 = arith.constant 0 : index
      %12 = vector.load %arg6[%c0_10, %c0_11] : memref<2x32xf32, #tpu.memory_space<vmem>>, vector<2x32xf32>
      tpu.vector_store %arg6[%c0_10, %c0_11], %11 {strides = array<i32>} : memref<2x32xf32, #tpu.memory_space<vmem>>, vector<2x32xf32>,
    } else {
    }
    %c0 = arith.constant 0 : index
    %c0_1 = arith.constant 0 : index
    %c0_2 = arith.constant 0 : index
    %3 = vector.load %arg2[%c0, %c0_1, %c0_2] : memref<2x8x32xf32, #tpu.memory_space<vmem>>, vector<2x8x32xf32>
    %c0_3 = arith.constant 0 : index
    %c0_4 = arith.constant 0 : index
    %4 = vector.load %arg6[%c0_3, %c0_4] : memref<2x32xf32, #tpu.memory_space<vmem>>, vector<2x32xf32>
    %cst = arith.constant dense<0.000000e+00> : vector<2x32xf32>
    %5 = vector.multi_reduction <add>, %3, %cst [1] : vector<2x8x32xf32> to vector<2x32xf32>
    %6 = arith.addf %4, %5 : vector<2x32xf32>
    %c0_5 = arith.constant 0 : index
    %c0_6 = arith.constant 0 : index
    %7 = vector.load %arg6[%c0_5, %c0_6] : memref<2x32xf32, #tpu.memory_space<vmem>>, vector<2x32xf32>
    tpu.vector_store %arg6[%c0_5, %c0_6], %6 {strides = array<i32>} : memref<2x32xf32, #tpu.memory_space<vmem>>, vector<2x32xf32>,
    %c0_i32_7 = arith.constant 0 : i32
    %8 = arith.cmpi eq, %arg1, %c0_i32_7 : i32
    %9 = arith.extui %8 : i1 to i32
    %c0_i32_8 = arith.constant 0 : i32
    %10 = arith.cmpi ne, %9, %c0_i32_8 : i32
    scf.if %10 {
      %c0_9 = arith.constant 0 : index
      %c0_10 = arith.constant 0 : index
      %11 = vector.load %arg6[%c0_9, %c0_10] : memref<2x32xf32, #tpu.memory_space<vmem>>, vector<2x32xf32>
      %cst_11 = arith.constant 1.250000e-01 : f32
      %12 = vector.broadcast %cst_11 : f32 to vector<2x32xf32>
      %13 = arith.mulf %11, %12 : vector<2x32xf32>
      %c0_12 = arith.constant 0 : index
      %c0_13 = arith.constant 0 : index
      %14 = vector.load %arg3[%c0_12, %c0_13] : memref<32x128xf32, #tpu.memory_space<vmem>>, vector<32x128xf32>
      %cst_14 = arith.constant dense<0.000000e+00> : vector<2x128xf32>
      %15 = tpu.matmul %13, %14, %cst_14 {dimension_numbers = #tpu.dot_dimension_numbers<[1], [0], [0], [1], [0, 0, 1, 1], [], []>} : vector<2x32xf32>, vector<32x128xf32>, vector<2x128xf32> -> vector<2x128xf32>
      %c0_15 = arith.constant 0 : index
      %c0_16 = arith.constant 0 : index
      %16 = vector.load %arg4[%c0_15, %c0_16] : memref<1x128xf32, #tpu.memory_space<vmem>>, vector<1x128xf32>
      %17 = vector.broadcast %16 : vector<1x128xf32> to vector<2x128xf32>
      %18 = arith.addf %15, %17 : vector<2x128xf32>
      %c0_17 = arith.constant 0 : index
      %c0_18 = arith.constant 0 : index
      %19 = vector.load %arg5[%c0_17, %c0_18] : memref<2x128xf32, #tpu.memory_space<vmem>>, vector<2x128xf32>
      tpu.vector_store %arg5[%c0_17, %c0_18], %18 {strides = array<i32>} : memref<2x128xf32, #tpu.memory_space<vmem>>, vector<2x128xf32>,
    } else {
    }
    return
  }
  func.func @transform_0(%arg0: i32, %arg1: i32) -> (i32, i32, i32) {
    %c0_i32 = arith.constant 0 : i32
    %c0_i32_0 = arith.constant 0 : i32
    return %arg0, %arg1, %c0_i32 : i32, i32, i32
  }
  func.func @transform_1(%arg0: i32, %arg1: i32) -> (i32, i32) {
    %c0_i32 = arith.constant 0 : i32
    %c0_i32_0 = arith.constant 0 : i32
    %c0_i32_1 = arith.constant 0 : i32
    return %c0_i32, %c0_i32_0 : i32, i32
  }
  func.func @transform_2(%arg0: i32, %arg1: i32) -> (i32, i32) {
    %c0_i32 = arith.constant 0 : i32
    %c0_i32_0 = arith.constant 0 : i32
    %c0_i32_1 = arith.constant 0 : i32
    return %c0_i32, %c0_i32_0 : i32, i32
  }
  func.func @transform_3(%arg0: i32, %arg1: i32) -> (i32, i32) {
    %c0_i32 = arith.constant 0 : i32
    %c0_i32_0 = arith.constant 0 : i32
    return %arg0, %c0_i32 : i32, i32
  }
}

module attributes {stable_mosaic.version = 11 : i64} {
  func.func @_mlp_kernel(%arg0: i32, %arg1: i32, %arg2: memref<2x8x32xf32, #tpu.memory_space<vmem>>, %arg3: memref<32x128xf32, #tpu.memory_space<vmem>>, %arg4: memref<1x128xf32, #tpu.memory_space<vmem>>, %arg5: memref<2x128xf32, #tpu.memory_space<vmem>>, %arg6: memref<2x32xf32, #tpu.memory_space<vmem>>) attributes {dimension_semantics = [#tpu.dimension_semantics<parallel>, #tpu.dimension_semantics<arbitrary>], iteration_bounds = array<i64: 1, 1>, scalar_prefetch = 0 : i64, scratch_operands = 1 : i64, tpu.core_type = #tpu.core_type<tc>, window_params = [{transform_indices = @transform_0, window_bounds = array<i64: 2, 8, 32>}, {pipeline_mode = #tpu.pipeline_mode<synchronous>, transform_indices = @transform_1, window_bounds = array<i64: 32, 128>}, {pipeline_mode = #tpu.pipeline_mode<synchronous>, transform_indices = @transform_2, window_bounds = array<i64: 1, 128>}, {transform_indices = @transform_3, window_bounds = array<i64: 2, 128>}]} {
    %c0_i32 = arith.constant 0 : i32
    %0 = arith.cmpi eq, %arg1, %c0_i32 : i32
    %1 = arith.extui %0 : i1 to i32
    %c0_i32_0 = arith.constant 0 : i32
    %2 = arith.cmpi ne, %1, %c0_i32_0 : i32
    scf.if %2 {
      %cst_9 = arith.constant 0.000000e+00 : f32
      %11 = vector.broadcast %cst_9 : f32 to vector<2x32xf32>
      %c0_10 = arith.constant 0 : index
      %c0_11 = arith.constant 0 : index
      %12 = vector.load %arg6[%c0_10, %c0_11] : memref<2x32xf32, #tpu.memory_space<vmem>>, vector<2x32xf32>
      tpu.vector_store %arg6[%c0_10, %c0_11], %11 {strides = array<i32>} : memref<2x32xf32, #tpu.memory_space<vmem>>, vector<2x32xf32>,
    } else {
    }
    %c0 = arith.constant 0 : index
    %c0_1 = arith.constant 0 : index
    %c0_2 = arith.constant 0 : index
    %3 = vector.load %arg2[%c0, %c0_1, %c0_2] : memref<2x8x32xf32, #tpu.memory_space<vmem>>, vector<2x8x32xf32>
    %c0_3 = arith.constant 0 : index
    %c0_4 = arith.constant 0 : index
    %4 = vector.load %arg6[%c0_3, %c0_4] : memref<2x32xf32, #tpu.memory_space<vmem>>, vector<2x32xf32>
    %cst = arith.constant dense<0.000000e+00> : vector<2x32xf32>
    %5 = vector.multi_reduction <add>, %3, %cst [1] : vector<2x8x32xf32> to vector<2x32xf32>
    %6 = arith.addf %4, %5 : vector<2x32xf32>
    %c0_5 = arith.constant 0 : index
    %c0_6 = arith.constant 0 : index
    %7 = vector.load %arg6[%c0_5, %c0_6] : memref<2x32xf32, #tpu.memory_space<vmem>>, vector<2x32xf32>
    tpu.vector_store %arg6[%c0_5, %c0_6], %6 {strides = array<i32>} : memref<2x32xf32, #tpu.memory_space<vmem>>, vector<2x32xf32>,
    %c0_i32_7 = arith.constant 0 : i32
    %8 = arith.cmpi eq, %arg1, %c0_i32_7 : i32
    %9 = arith.extui %8 : i1 to i32
    %c0_i32_8 = arith.constant 0 : i32
    %10 = arith.cmpi ne, %9, %c0_i32_8 : i32
    scf.if %10 {
      %c0_9 = arith.constant 0 : index
      %c0_10 = arith.constant 0 : index
      %11 = vector.load %arg6[%c0_9, %c0_10] : memref<2x32xf32, #tpu.memory_space<vmem>>, vector<2x32xf32>
      %cst_11 = arith.constant 1.250000e-01 : f32
      %12 = vector.broadcast %cst_11 : f32 to vector<2x32xf32>
      %13 = arith.mulf %11, %12 : vector<2x32xf32>
      %c0_12 = arith.constant 0 : index
      %c0_13 = arith.constant 0 : index
      %14 = vector.load %arg3[%c0_12, %c0_13] : memref<32x128xf32, #tpu.memory_space<vmem>>, vector<32x128xf32>
      %cst_14 = arith.constant dense<0.000000e+00> : vector<2x128xf32>
      %15 = tpu.matmul %13, %14, %cst_14 {dimension_numbers = #tpu.dot_dimension_numbers<[1], [0], [0], [1], [0, 0, 1, 1], [], []>} : vector<2x32xf32>, vector<32x128xf32>, vector<2x128xf32> -> vector<2x128xf32>
      %c0_15 = arith.constant 0 : index
      %c0_16 = arith.constant 0 : index
      %16 = vector.load %arg4[%c0_15, %c0_16] : memref<1x128xf32, #tpu.memory_space<vmem>>, vector<1x128xf32>
      %17 = vector.broadcast %16 : vector<1x128xf32> to vector<2x128xf32>
      %18 = arith.addf %15, %17 : vector<2x128xf32>
      %c0_17 = arith.constant 0 : index
      %c0_18 = arith.constant 0 : index
      %19 = vector.load %arg5[%c0_17, %c0_18] : memref<2x128xf32, #tpu.memory_space<vmem>>, vector<2x128xf32>
      tpu.vector_store %arg5[%c0_17, %c0_18], %18 {strides = array<i32>} : memref<2x128xf32, #tpu.memory_space<vmem>>, vector<2x128xf32>,
    } else {
    }
    return
  }
  func.func @transform_0(%arg0: i32, %arg1: i32) -> (i32, i32, i32) {
    %c0_i32 = arith.constant 0 : i32
    %c0_i32_0 = arith.constant 0 : i32
    return %arg0, %arg1, %c0_i32 : i32, i32, i32
  }
  func.func @transform_1(%arg0: i32, %arg1: i32) -> (i32, i32) {
    %c0_i32 = arith.constant 0 : i32
    %c0_i32_0 = arith.constant 0 : i32
    %c0_i32_1 = arith.constant 0 : i32
    return %c0_i32, %c0_i32_0 : i32, i32
  }
  func.func @transform_2(%arg0: i32, %arg1: i32) -> (i32, i32) {
    %c0_i32 = arith.constant 0 : i32
    %c0_i32_0 = arith.constant 0 : i32
    %c0_i32_1 = arith.constant 0 : i32
    return %c0_i32, %c0_i32_0 : i32, i32
  }
  func.func @transform_3(%arg0: i32, %arg1: i32) -> (i32, i32) {
    %c0_i32 = arith.constant 0 : i32
    %c0_i32_0 = arith.constant 0 : i32
    return %arg0, %c0_i32 : i32, i32
  }
}

</mosaic_0001>

<llo_original>
// kernel: tpu_custom_call.1
$region0: #{tpu_custom_call.1}
  #allocation0 [shape = 'u32[]', space=smem, size = 0x4, offset = 0x4, fixed_abs, tag = 'smem constant byte address 0x4 - core index']
  #allocation1 [shape = 'u32[144,128]{1,0:T(1,128)}', space=vmem, size = 0x12000, scoped, tag = 'internal scratch']
  #allocation2 [shape = 'f32[2,32]{1,0:T(2,128)}', space=vmem, size = 0x400, scoped, tag = 'scratch operand']
  %s0 = inlined_call_operand.hbm [shape: f32[2,8,32], index: 0, kind: input, shape index: {}]
  %s1 = inlined_call_operand.hbm [shape: f32[32,128], index: 1, kind: input, shape index: {}]
  %s2 = inlined_call_operand.vmem [shape: f32[1,128], index: 2, kind: input, shape index: {}]
  %s3 = inlined_call_operand.hbm [shape: f32[2,128], index: 3, kind: output, shape index: {}]
  %s4 = sld [smem:[#allocation0]]
  $region38: #{tpu_custom_call.1} parent=0
    _
  %s6 = ssub.s32 1, %s4
  %s7 = scalar_select 0, %s6, %s4
  $region1: #{tpu_custom_call.1} parent=0
    #allocation3 [shape = 'u8[8192]{0}', space=vmem, size = 0x2000, scoped, tag = 'input window, operand 0, single buffered']
    #allocation4 [shape = 's32[1]{0}', space=sflag, size = 0x4, scoped, tag = 'scoped memory for tpu_custom_call.1']
    #allocation5 [shape = 's32[1]{0}', space=sflag, size = 0x4, scoped, tag = 'scoped memory for tpu_custom_call.1']
    #allocation6 [shape = 'u8[16384]{0}', space=vmem, size = 0x4000, scoped, tag = 'input window, operand 1, single buffered']
    #allocation7 [shape = 's32[1]{0}', space=sflag, size = 0x4, scoped, tag = 'scoped memory for tpu_custom_call.1']
    #allocation8 [shape = 'u8[1024]{0}', space=vmem, size = 0x400, scoped, tag = 'output window, operand 0, single buffered']
    %8 = vsyncpa [#allocation4], 0
    %9 = vsyncpa [#allocation7], 0
    %10 = vsyncpa [#allocation5], 0
    // Predicated region
    $region2: #{tpu_custom_call.1} parent=1 // pred_check
      _
    $region3: #{tpu_custom_call.1} parent=1 // pred_check_branch
      %12 = sbr.rel (0) target = $region5
    $region4: #{tpu_custom_call.1} parent=1 // pred_region
      %s14 = ssub.s32 256, 256
      %15 = vsyncadd [#allocation4], %s14
      %s16 = sshll.u32 [#allocation3], 4
      %s17 = int_to_ptr.vmem [resolvable:$true] %s16
      %22 = dma.hbm_to_vmem [thread:$0]  %s0, 256, %s17, [#allocation4], 128, 128, 8
    $region5: #{tpu_custom_call.1} parent=1 // pred_fallthru
      _
    // Predicated region
    $region6: #{tpu_custom_call.1} parent=1 // pred_check
      _
    $region7: #{tpu_custom_call.1} parent=1 // pred_check_branch
      %24 = sbr.rel (0) target = $region9
    $region8: #{tpu_custom_call.1} parent=1 // pred_region
      %s26 = ssub.s32 512, 512
      %27 = vsyncadd [#allocation7], %s26
      %s28 = sshll.u32 [#allocation6], 4
      %s29 = int_to_ptr.vmem [resolvable:$true] %s28
      %34 = dma.hbm_to_vmem [thread:$0]  %s1, 512, %s29, [#allocation7], 128, 128, 8
    $region9: #{tpu_custom_call.1} parent=1 // pred_fallthru
      _
    // Predicated region
    $region10: #{tpu_custom_call.1} parent=1 // pred_check
      _
    $region11: #{tpu_custom_call.1} parent=1 // pred_check_branch
      %36 = sbr.rel (0) target = $region13
    $region12: #{tpu_custom_call.1} parent=1 // pred_region
      _
    $region13: #{tpu_custom_call.1} parent=1 // pred_fallthru
      _
    // Predicated region
    $region14: #{tpu_custom_call.1} parent=1 // pred_check
      _
    $region15: #{tpu_custom_call.1} parent=1 // pred_check_branch
      %38 = sbr.rel (0) target = $region17
    $region16: #{tpu_custom_call.1} parent=1 // pred_region
      %39 = dma.done [#allocation4], 256
    $region17: #{tpu_custom_call.1} parent=1 // pred_fallthru
      _
    // Predicated region
    $region18: #{tpu_custom_call.1} parent=1 // pred_check
      _
    $region19: #{tpu_custom_call.1} parent=1 // pred_check_branch
      %41 = sbr.rel (0) target = $region21
    $region20: #{tpu_custom_call.1} parent=1 // pred_region
      %42 = dma.done [#allocation7], 512
    $region21: #{tpu_custom_call.1} parent=1 // pred_fallthru
      _
    %p43 = scmp.eq.s32.totalorder 0, 0
    // Predicated region
    $region22: #{tpu_custom_call.1} parent=1 // pred_check
      %p44 = pneg %p43
    $region23: #{tpu_custom_call.1} parent=1 // pred_check_branch
      %46 = sbr.rel (%p44) target = $region25
    $region24: #{tpu_custom_call.1} parent=1 // pred_region
      %vm47 = vcmask 254976
      %48 = vst.msk [vmem:[#allocation2] sm:$0x3] %vm47, 0.0
    $region25: #{tpu_custom_call.1} parent=1 // pred_fallthru
      _
    %v49 = vld [vmem:[#allocation3] sm:$0xff]
    %v50 = vld [vmem:[#allocation3 + $0x8] sm:$0xff]
    %v51 = vld [vmem:[#allocation2] sm:$0x3]
    %vm52 = vcmask 261120
    %v53 = vsel %vm52, %v49, 0.0
    %v54 = vrot.slane %v53, 4
    %v55 = vadd.f32 %v53, %v54
    %v56 = vrot.slane %v55, 2
    %v57 = vadd.f32 %v55, %v56
    %v58 = vrot.slane %v57, 1
    %v59 = vadd.f32 %v57, %v58
    %v60 = vsel %vm52, %v50, 0.0
    %v61 = vrot.slane %v60, 4
    %v62 = vadd.f32 %v60, %v61
    %v63 = vrot.slane %v62, 2
    %v64 = vadd.f32 %v62, %v63
    %v65 = vrot.slane %v64, 1
    %v66 = vadd.f32 %v64, %v65
    %vm69 = vcmask 1041409
    %v70 = vsel %vm69, %v66, %v59
    %v72 = vadd.f32 %v51, %v70
    %vm73 = vcmask 254976
    %74 = vst.msk [vmem:[#allocation2] sm:$0x3] %vm73, %v72
    // Predicated region
    $region26: #{tpu_custom_call.1} parent=1 // pred_check
      %p75 = pneg %p43
    $region27: #{tpu_custom_call.1} parent=1 // pred_check_branch
      %77 = sbr.rel (%p75) target = $region29
    $region28: #{tpu_custom_call.1} parent=1 // pred_region
      %v78 = vld [vmem:[#allocation2] sm:$0x3]
      %v79 = vmul.f32 %v78, 0.125
      %v80 = vld [vmem:[#allocation6] sm:$0xff]
      %v81 = vld [vmem:[#allocation6 + $0x8] sm:$0xff]
      %v82 = vld [vmem:[#allocation6 + $0x10] sm:$0xff]
      %v83 = vld [vmem:[#allocation6 + $0x18] sm:$0xff]
      %v84 = vld [vmem:[%s2] sm:$0x1]
      %v86 = vlaneseq
      %v87 = vshrl.u32 %v86, 7
      %v88 = vsub.s32 0, %v87
      %v89 = vrot.slane %v84, %v88
      %v92 = vsel %vm52, %v79, 0
      %94 = vmatprep.subr.mxu0 0.0
      %95 = vmatpush1.msra.mxu0 %v80
      %96 = vmatprep.subr.mxu0 0.0
      %97 = vmatpush1.msra.mxu0 %v81
      %98 = vmatprep.subr.mxu0 0.0
      %99 = vmatpush1.msra.mxu0 %v82
      %100 = vmatprep.subr.mxu0 0.0
      %101 = vmatpush1.msra.mxu0 %v83
      %102 = vmatprep.subr.mxu0 0.0
      %103 = vmatpush1.msra.mxu0 0.0
      %104 = vmatprep.subr.mxu0 0.0
      %105 = vmatpush1.msra.mxu0 0.0
      %106 = vmatprep.subr.mxu0 0.0
      %107 = vmatpush1.msra.mxu0 0.0
      %108 = vmatprep.subr.mxu0 0.0
      %109 = vmatpush1.msra.mxu0 0.0
      %110 = vmatprep.subr.mxu0 0.0
      %111 = vmatpush1.msra.mxu0 0.0
      %112 = vmatprep.subr.mxu0 0.0
      %113 = vmatpush1.msra.mxu0 0.0
      %114 = vmatprep.subr.mxu0 0.0
      %115 = vmatpush1.msra.mxu0 0.0
      %116 = vmatprep.subr.mxu0 0.0
      %117 = vmatpush1.msra.mxu0 0.0
      %118 = vmatprep.subr.mxu0 0.0
      %119 = vmatpush1.msra.mxu0 0.0
      %120 = vmatprep.subr.mxu0 0.0
      %121 = vmatpush1.msra.mxu0 0.0
      %122 = vmatprep.subr.mxu0 0.0
      %123 = vmatpush1.msra.mxu0 0.0
      %124 = vmatprep.subr.mxu0 0.0
      %125 = vmatpush1.msra.mxu0 0.0
      %126 = vmatprep.subr.mxu0 0.0
      %127 = vmatpush1.msra.mxu0 0.0
      %128 = vmatprep.subr.mxu0 0.0
      %129 = vmatpush1.msra.mxu0 0.0
      %130 = vmatprep.subr.mxu0 0.0
      %131 = vmatpush1.msra.mxu0 0.0
      %132 = vmatprep.subr.mxu0 0.0
      %133 = vmatpush1.msra.mxu0 0.0
      %134 = vmatprep.subr.mxu0 0.0
      %135 = vmatpush1.msra.mxu0 0.0
      %136 = vmatprep.subr.mxu0 0.0
      %137 = vmatpush1.msra.mxu0 0.0
      %138 = vmatprep.subr.mxu0 0.0
      %139 = vmatpush1.msra.mxu0 0.0
      %140 = vmatprep.subr.mxu0 0.0
      %141 = vmatpush1.msra.mxu0 0.0
      %142 = vmatprep.subr.mxu0 0.0
      %143 = vmatpush1.msra.mxu0 0.0
      %144 = vmatprep.subr.mxu0 0.0
      %145 = vmatpush1.msra.mxu0 0.0
      %146 = vmatprep.subr.mxu0 0.0
      %147 = vmatpush1.msra.mxu0 0.0
      %148 = vmatprep.subr.mxu0 0.0
      %149 = vmatpush1.msra.mxu0 0.0
      %150 = vmatprep.subr.mxu0 0.0
      %151 = vmatpush1.msra.mxu0 0.0
      %152 = vmatprep.subr.mxu0 0.0
      %153 = vmatpush1.msra.mxu0 0.0
      %154 = vmatprep.subr.mxu0 0.0
      %155 = vmatpush1.msra.mxu0 0.0
      %156 = vmatprep.subr.mxu0 0.0
      %157 = vmatpush1.msra.mxu0 0.0
      %158 = vmatprep.mubr.f32.mxu0 0.0
      %159 = vmatmul.mubr.f32.gmra.mrb[0].mxu0 %v92
      %v160 = vpop.f32.mrb[0].mxu0
      %v161 = vadd.f32 %v89, %v160
      %v162 = vpop.f32.mrb[0].mxu0
      %163 = vdwg.mxu0
      %164 = vst [vmem:[#allocation8] sm:$0x3] %v161
    $region29: #{tpu_custom_call.1} parent=1 // pred_fallthru
      _
    // Predicated region
    $region30: #{tpu_custom_call.1} parent=1 // pred_check
      _
    $region31: #{tpu_custom_call.1} parent=1 // pred_check_branch
      %166 = sbr.rel (0) target = $region33
    $region32: #{tpu_custom_call.1} parent=1 // pred_region
      %s168 = ssub.s32 32, 32
      %169 = vsyncadd [#allocation5], %s168
      %s171 = sshll.u32 [#allocation8], 4
      %s172 = int_to_ptr.vmem [resolvable:$true] %s171
      %174 = dma.vmem_to_hbm [thread:$0]  %s172, 32, %s3, [#allocation5]
    $region33: #{tpu_custom_call.1} parent=1 // pred_fallthru
      _
    // Predicated region
    $region34: #{tpu_custom_call.1} parent=1 // pred_check
      _
    $region35: #{tpu_custom_call.1} parent=1 // pred_check_branch
      %176 = sbr.rel (0) target = $region37
    $region36: #{tpu_custom_call.1} parent=1 // pred_region
      %177 = dma.done [#allocation5], 32
    $region37: #{tpu_custom_call.1} parent=1 // pred_fallthru
      _
    %178 = vsyncpa [#allocation4], 1
    %179 = vsyncpa [#allocation7], 1
    %180 = vsyncpa [#allocation5], 1

// kernel: tpu_custom_call.1
$region0: #{tpu_custom_call.1}
  #allocation0 [shape = 'u32[]', space=smem, size = 0x4, offset = 0x4, fixed_abs, tag = 'smem constant byte address 0x4 - core index']
  #allocation1 [shape = 'u32[144,128]{1,0:T(1,128)}', space=vmem, size = 0x12000, scoped, tag = 'internal scratch']
  #allocation2 [shape = 'f32[2,32]{1,0:T(2,128)}', space=vmem, size = 0x400, scoped, tag = 'scratch operand']
  %s0 = inlined_call_operand.hbm [shape: f32[2,8,32], index: 0, kind: input, shape index: {}]
  %s1 = inlined_call_operand.hbm [shape: f32[32,128], index: 1, kind: input, shape index: {}]
  %s2 = inlined_call_operand.vmem [shape: f32[1,128], index: 2, kind: input, shape index: {}]
  %s3 = inlined_call_operand.hbm [shape: f32[2,128], index: 3, kind: output, shape index: {}]
  %s4 = sld [smem:[#allocation0]]
  $region38: #{tpu_custom_call.1} parent=0
    _
  %s6 = ssub.s32 1, %s4
  %s7 = scalar_select 0, %s6, %s4
  $region1: #{tpu_custom_call.1} parent=0
    #allocation3 [shape = 'u8[8192]{0}', space=vmem, size = 0x2000, scoped, tag = 'input window, operand 0, single buffered']
    #allocation4 [shape = 's32[1]{0}', space=sflag, size = 0x4, scoped, tag = 'scoped memory for tpu_custom_call.1']
    #allocation5 [shape = 's32[1]{0}', space=sflag, size = 0x4, scoped, tag = 'scoped memory for tpu_custom_call.1']
    #allocation6 [shape = 'u8[16384]{0}', space=vmem, size = 0x4000, scoped, tag = 'input window, operand 1, single buffered']
    #allocation7 [shape = 's32[1]{0}', space=sflag, size = 0x4, scoped, tag = 'scoped memory for tpu_custom_call.1']
    #allocation8 [shape = 'u8[1024]{0}', space=vmem, size = 0x400, scoped, tag = 'output window, operand 0, single buffered']
    %8 = vsyncpa [#allocation4], 0
    %9 = vsyncpa [#allocation7], 0
    %10 = vsyncpa [#allocation5], 0
    // Predicated region
    $region2: #{tpu_custom_call.1} parent=1 // pred_check
      _
    $region3: #{tpu_custom_call.1} parent=1 // pred_check_branch
      %12 = sbr.rel (0) target = $region5
    $region4: #{tpu_custom_call.1} parent=1 // pred_region
      %s14 = ssub.s32 256, 256
      %15 = vsyncadd [#allocation4], %s14
      %s16 = sshll.u32 [#allocation3], 4
      %s17 = int_to_ptr.vmem [resolvable:$true] %s16
      %22 = dma.hbm_to_vmem [thread:$0]  %s0, 256, %s17, [#allocation4], 128, 128, 8
    $region5: #{tpu_custom_call.1} parent=1 // pred_fallthru
      _
    // Predicated region
    $region6: #{tpu_custom_call.1} parent=1 // pred_check
      _
    $region7: #{tpu_custom_call.1} parent=1 // pred_check_branch
      %24 = sbr.rel (0) target = $region9
    $region8: #{tpu_custom_call.1} parent=1 // pred_region
      %s26 = ssub.s32 512, 512
      %27 = vsyncadd [#allocation7], %s26
      %s28 = sshll.u32 [#allocation6], 4
      %s29 = int_to_ptr.vmem [resolvable:$true] %s28
      %34 = dma.hbm_to_vmem [thread:$0]  %s1, 512, %s29, [#allocation7], 128, 128, 8
    $region9: #{tpu_custom_call.1} parent=1 // pred_fallthru
      _
    // Predicated region
    $region10: #{tpu_custom_call.1} parent=1 // pred_check
      _
    $region11: #{tpu_custom_call.1} parent=1 // pred_check_branch
      %36 = sbr.rel (0) target = $region13
    $region12: #{tpu_custom_call.1} parent=1 // pred_region
      _
    $region13: #{tpu_custom_call.1} parent=1 // pred_fallthru
      _
    // Predicated region
    $region14: #{tpu_custom_call.1} parent=1 // pred_check
      _
    $region15: #{tpu_custom_call.1} parent=1 // pred_check_branch
      %38 = sbr.rel (0) target = $region17
    $region16: #{tpu_custom_call.1} parent=1 // pred_region
      %39 = dma.done [#allocation4], 256
    $region17: #{tpu_custom_call.1} parent=1 // pred_fallthru
      _
    // Predicated region
    $region18: #{tpu_custom_call.1} parent=1 // pred_check
      _
    $region19: #{tpu_custom_call.1} parent=1 // pred_check_branch
      %41 = sbr.rel (0) target = $region21
    $region20: #{tpu_custom_call.1} parent=1 // pred_region
      %42 = dma.done [#allocation7], 512
    $region21: #{tpu_custom_call.1} parent=1 // pred_fallthru
      _
    %p43 = scmp.eq.s32.totalorder 0, 0
    // Predicated region
    $region22: #{tpu_custom_call.1} parent=1 // pred_check
      %p44 = pneg %p43
    $region23: #{tpu_custom_call.1} parent=1 // pred_check_branch
      %46 = sbr.rel (%p44) target = $region25
    $region24: #{tpu_custom_call.1} parent=1 // pred_region
      %vm47 = vcmask 254976
      %48 = vst.msk [vmem:[#allocation2] sm:$0x3] %vm47, 0.0
    $region25: #{tpu_custom_call.1} parent=1 // pred_fallthru
      _
    %v49 = vld [vmem:[#allocation3] sm:$0xff]
    %v50 = vld [vmem:[#allocation3 + $0x8] sm:$0xff]
    %v51 = vld [vmem:[#allocation2] sm:$0x3]
    %vm52 = vcmask 261120
    %v53 = vsel %vm52, %v49, 0.0
    %v54 = vrot.slane %v53, 4
    %v55 = vadd.f32 %v53, %v54
    %v56 = vrot.slane %v55, 2
    %v57 = vadd.f32 %v55, %v56
    %v58 = vrot.slane %v57, 1
    %v59 = vadd.f32 %v57, %v58
    %v60 = vsel %vm52, %v50, 0.0
    %v61 = vrot.slane %v60, 4
    %v62 = vadd.f32 %v60, %v61
    %v63 = vrot.slane %v62, 2
    %v64 = vadd.f32 %v62, %v63
    %v65 = vrot.slane %v64, 1
    %v66 = vadd.f32 %v64, %v65
    %vm69 = vcmask 1041409
    %v70 = vsel %vm69, %v66, %v59
    %v72 = vadd.f32 %v51, %v70
    %vm73 = vcmask 254976
    %74 = vst.msk [vmem:[#allocation2] sm:$0x3] %vm73, %v72
    // Predicated region
    $region26: #{tpu_custom_call.1} parent=1 // pred_check
      %p75 = pneg %p43
    $region27: #{tpu_custom_call.1} parent=1 // pred_check_branch
      %77 = sbr.rel (%p75) target = $region29
    $region28: #{tpu_custom_call.1} parent=1 // pred_region
      %v78 = vld [vmem:[#allocation2] sm:$0x3]
      %v79 = vmul.f32 %v78, 0.125
      %v80 = vld [vmem:[#allocation6] sm:$0xff]
      %v81 = vld [vmem:[#allocation6 + $0x8] sm:$0xff]
      %v82 = vld [vmem:[#allocation6 + $0x10] sm:$0xff]
      %v83 = vld [vmem:[#allocation6 + $0x18] sm:$0xff]
      %v84 = vld [vmem:[%s2] sm:$0x1]
      %v86 = vlaneseq
      %v87 = vshrl.u32 %v86, 7
      %v88 = vsub.s32 0, %v87
      %v89 = vrot.slane %v84, %v88
      %v92 = vsel %vm52, %v79, 0
      %94 = vmatprep.subr.mxu0 0.0
      %95 = vmatpush1.msra.mxu0 %v80
      %96 = vmatprep.subr.mxu0 0.0
      %97 = vmatpush1.msra.mxu0 %v81
      %98 = vmatprep.subr.mxu0 0.0
      %99 = vmatpush1.msra.mxu0 %v82
      %100 = vmatprep.subr.mxu0 0.0
      %101 = vmatpush1.msra.mxu0 %v83
      %102 = vmatprep.subr.mxu0 0.0
      %103 = vmatpush1.msra.mxu0 0.0
      %104 = vmatprep.subr.mxu0 0.0
      %105 = vmatpush1.msra.mxu0 0.0
      %106 = vmatprep.subr.mxu0 0.0
      %107 = vmatpush1.msra.mxu0 0.0
      %108 = vmatprep.subr.mxu0 0.0
      %109 = vmatpush1.msra.mxu0 0.0
      %110 = vmatprep.subr.mxu0 0.0
      %111 = vmatpush1.msra.mxu0 0.0
      %112 = vmatprep.subr.mxu0 0.0
      %113 = vmatpush1.msra.mxu0 0.0
      %114 = vmatprep.subr.mxu0 0.0
      %115 = vmatpush1.msra.mxu0 0.0
      %116 = vmatprep.subr.mxu0 0.0
      %117 = vmatpush1.msra.mxu0 0.0
      %118 = vmatprep.subr.mxu0 0.0
      %119 = vmatpush1.msra.mxu0 0.0
      %120 = vmatprep.subr.mxu0 0.0
      %121 = vmatpush1.msra.mxu0 0.0
      %122 = vmatprep.subr.mxu0 0.0
      %123 = vmatpush1.msra.mxu0 0.0
      %124 = vmatprep.subr.mxu0 0.0
      %125 = vmatpush1.msra.mxu0 0.0
      %126 = vmatprep.subr.mxu0 0.0
      %127 = vmatpush1.msra.mxu0 0.0
      %128 = vmatprep.subr.mxu0 0.0
      %129 = vmatpush1.msra.mxu0 0.0
      %130 = vmatprep.subr.mxu0 0.0
      %131 = vmatpush1.msra.mxu0 0.0
      %132 = vmatprep.subr.mxu0 0.0
      %133 = vmatpush1.msra.mxu0 0.0
      %134 = vmatprep.subr.mxu0 0.0
      %135 = vmatpush1.msra.mxu0 0.0
      %136 = vmatprep.subr.mxu0 0.0
      %137 = vmatpush1.msra.mxu0 0.0
      %138 = vmatprep.subr.mxu0 0.0
      %139 = vmatpush1.msra.mxu0 0.0
      %140 = vmatprep.subr.mxu0 0.0
      %141 = vmatpush1.msra.mxu0 0.0
      %142 = vmatprep.subr.mxu0 0.0
      %143 = vmatpush1.msra.mxu0 0.0
      %144 = vmatprep.subr.mxu0 0.0
      %145 = vmatpush1.msra.mxu0 0.0
      %146 = vmatprep.subr.mxu0 0.0
      %147 = vmatpush1.msra.mxu0 0.0
      %148 = vmatprep.subr.mxu0 0.0
      %149 = vmatpush1.msra.mxu0 0.0
      %150 = vmatprep.subr.mxu0 0.0
      %151 = vmatpush1.msra.mxu0 0.0
      %152 = vmatprep.subr.mxu0 0.0
      %153 = vmatpush1.msra.mxu0 0.0
      %154 = vmatprep.subr.mxu0 0.0
      %155 = vmatpush1.msra.mxu0 0.0
      %156 = vmatprep.subr.mxu0 0.0
      %157 = vmatpush1.msra.mxu0 0.0
      %158 = vmatprep.mubr.f32.mxu0 0.0
      %159 = vmatmul.mubr.f32.gmra.mrb[0].mxu0 %v92
      %v160 = vpop.f32.mrb[0].mxu0
      %v161 = vadd.f32 %v89, %v160
      %v162 = vpop.f32.mrb[0].mxu0
      %163 = vdwg.mxu0
      %164 = vst [vmem:[#allocation8] sm:$0x3] %v161
    $region29: #{tpu_custom_call.1} parent=1 // pred_fallthru
      _
    // Predicated region
    $region30: #{tpu_custom_call.1} parent=1 // pred_check
      _
    $region31: #{tpu_custom_call.1} parent=1 // pred_check_branch
      %166 = sbr.rel (0) target = $region33
    $region32: #{tpu_custom_call.1} parent=1 // pred_region
      %s168 = ssub.s32 32, 32
      %169 = vsyncadd [#allocation5], %s168
      %s171 = sshll.u32 [#allocation8], 4
      %s172 = int_to_ptr.vmem [resolvable:$true] %s171
      %174 = dma.vmem_to_hbm [thread:$0]  %s172, 32, %s3, [#allocation5]
    $region33: #{tpu_custom_call.1} parent=1 // pred_fallthru
      _
    // Predicated region
    $region34: #{tpu_custom_call.1} parent=1 // pred_check
      _
    $region35: #{tpu_custom_call.1} parent=1 // pred_check_branch
      %176 = sbr.rel (0) target = $region37
    $region36: #{tpu_custom_call.1} parent=1 // pred_region
      %177 = dma.done [#allocation5], 32
    $region37: #{tpu_custom_call.1} parent=1 // pred_fallthru
      _
    %178 = vsyncpa [#allocation4], 1
    %179 = vsyncpa [#allocation7], 1
    %180 = vsyncpa [#allocation5], 1

</llo_original>
